<compile_context>
chip_gen: v7x
topology: tpu7x:2x2x1
jax: 0.10.0
libtpu: 0.0.40
codegen_flags: <defaults>
</compile_context>

<pallas_src>
import functools

import jax
import jax.numpy as jnp
import numpy as np
from jax import lax
from jax.experimental import pallas as pl
from jax.experimental.pallas import tpu as pltpu


def _pos_add_kernel(x_ref, ai_ref, rp_ref, o_ref, *, H, TR):
    """x_ref/o_ref: (TR, W*C) block of x viewed as (B*H, W*C).
    ai_ref: (1, W*C) = a_i[c] tiled over W.   rp_ref: (1, W*C) = j*a_j + c0.
    pos[r, m] = (row(r) mod H) * ai[m] + rp[m]   (raw-view flat order)."""
    r0 = pl.program_id(0) * TR
    rows = r0 + lax.broadcasted_iota(jnp.int32, (TR, 1), 0)
    i_f = (rows % H).astype(jnp.float32)                        # (TR, 1)
    pos = i_f * ai_ref[...] + rp_ref[...]                       # (TR, W*C) f32
    o_ref[...] = (x_ref[...] + pos).astype(o_ref.dtype)


def _pick_block_rows(total_rows, row_bytes, budget_bytes=2 << 20, cap=None):
    """Row-block size: >=1 MiB-ish for HBM-roofline DMAs, small enough that
    2 streams x 2 pipeline buffers fit the scoped-VMEM default on v5e/v6e/v7x;
    a multiple of 8 (sublane) unless it spans the whole axis."""
    tr = max(1, budget_bytes // max(row_bytes, 1))
    if cap is not None:
        tr = min(tr, int(cap))
    tr = min(tr, total_rows)
    # Keep >= 2 grid steps when there is enough work so both v7x cores stream.
    if tr == total_rows and total_rows >= 16:
        tr = pl.cdiv(total_rows, 2)
    if tr < total_rows:
        tr = min(max(8, (tr // 8) * 8), total_rows)
    return int(tr)


def positional_embedding_forward(x, weight, bias, *, max_block_rows=None):
    """x: (B, C, H, W); weight: (C, 4) torch Linear weight; bias: (C,)."""
    B, C, H, W = x.shape
    assert H > 1 and W > 1, "torch module divides by (H-1) and (W-1)"
    WC = W * C
    rows = B * H

    w = jnp.asarray(weight, jnp.float32)                        # (C, 4)
    b = jnp.asarray(bias, jnp.float32)                          # (C,)
    # Fold the 4->C Linear into an affine function of (i, j):
    #   pos_hwc[i, j, c] = i*a_i[c] + j*a_j[c] + c0[c]
    a_j = (w[:, 0] - w[:, 2]) / jnp.float32(W - 1)              # (C,)
    a_i = (w[:, 1] - w[:, 3]) / jnp.float32(H - 1)              # (C,)
    c0 = w[:, 2] + w[:, 3] + b                                  # (C,)
    rowpos = (jnp.arange(W, dtype=jnp.float32)[:, None] * a_j[None, :]
              + c0[None, :]).reshape(1, WC)                     # j*a_j + c0
    ai_row = jnp.broadcast_to(a_i[None, :], (W, C)).reshape(1, WC)

    # Raw row-major reinterpretation of the NCHW tensor (bitcast, no copy).
    x2 = x.reshape(rows, WC)

    tr = _pick_block_rows(rows, WC * x.dtype.itemsize, cap=max_block_rows)
    grid = (pl.cdiv(rows, tr),)

    out2 = pl.pallas_call(
        functools.partial(_pos_add_kernel, H=H, TR=tr),
        out_shape=jax.ShapeDtypeStruct((rows, WC), x.dtype),
        grid=grid,
        in_specs=[
            pl.BlockSpec((tr, WC), lambda t: (t, 0)),
            pl.BlockSpec((1, WC), lambda t: (0, 0)),
            pl.BlockSpec((1, WC), lambda t: (0, 0)),
        ],
        out_specs=pl.BlockSpec((tr, WC), lambda t: (t, 0)),
        compiler_params=pltpu.CompilerParams(
            dimension_semantics=("parallel",)),
    )(x2, ai_row, rowpos)

    # Raw view back to NCHW (pure reinterpretation, as in torch).
    return out2.reshape(B, C, H, W)


def _reference(x, weight, bias):
    """Pure-JAX reference mirroring the torch forward exactly (no folding)."""
    B, C, H, W = x.shape
    j = jnp.arange(W, dtype=jnp.float32)
    i = jnp.arange(H, dtype=jnp.float32)
    jj, ii = jnp.meshgrid(j, i)                                 # (H, W)
    coords = jnp.stack(
        [jj / (W - 1), ii / (H - 1), (W - 1 - jj) / (W - 1), (H - 1 - ii) / (H - 1)],
        axis=-1)                                                # (H, W, 4)
    pos = (coords.reshape(H * W, 4) @ jnp.asarray(weight, jnp.float32).T
           + jnp.asarray(bias, jnp.float32))                    # (H*W, C)
    pos = jnp.broadcast_to(pos.reshape(1, H, W, C), (B, H, W, C))
    pos = pos.reshape(B, C, H, W)                               # raw view, as in torch
    return (x.astype(jnp.float32) + pos).astype(x.dtype)


if __name__ == "__main__":
    cases = [
        # (B, C, H,  W, dtype,        max_block_rows)
        (2, 128, 8,  8, jnp.float32,  None),   # lane-dense, W*C = 1024
        (2, 32,  8,  8, jnp.float32,  None),   # C < 128 but W*C = 256: lane-dense
        (2, 4,  16, 16, jnp.bfloat16, None),   # bf16 path; W*C = 64 (full-extent minor)
        (3, 128, 7,  8, jnp.float32,  8),      # ragged grid: B*H = 21 rows, TR = 8
    ]
    for (B, C, H, W, dtype, cap) in cases:
        key = jax.random.PRNGKey(0)
        kx, kw, kb = jax.random.split(key, 3)
        x = jax.random.normal(kx, (B, C, H, W), dtype=jnp.float32).astype(dtype)
        bound = 1.0 / np.sqrt(4.0)              # nn.Linear(4, C) default init range
        weight = jax.random.uniform(kw, (C, 4), jnp.float32, -bound, bound)
        bias = jax.random.uniform(kb, (C,), jnp.float32, -bound, bound)

        out = jax.block_until_ready(
            positional_embedding_forward(x, weight, bias, max_block_rows=cap))
        ref = _reference(x, weight, bias)
        tol = 2e-2 if dtype == jnp.bfloat16 else 1e-5
        np.testing.assert_allclose(
            np.asarray(out.astype(jnp.float32)),
            np.asarray(ref.astype(jnp.float32)),
            rtol=tol, atol=tol)

    print("KERNEL_OK")
</pallas_src>

<mosaic_0001>
module attributes {stable_mosaic.version = 11 : i64} {
  func.func @_pos_add_kernel(%arg0: i32, %arg1: memref<8x1024xf32, #tpu.memory_space<vmem>>, %arg2: memref<1x1024xf32, #tpu.memory_space<vmem>>, %arg3: memref<1x1024xf32, #tpu.memory_space<vmem>>, %arg4: memref<8x1024xf32, #tpu.memory_space<vmem>>) attributes {dimension_semantics = [#tpu.dimension_semantics<parallel>], iteration_bounds = array<i64: 2>, scalar_prefetch = 0 : i64, scratch_operands = 0 : i64, tpu.core_type = #tpu.core_type<tc>, window_params = [{transform_indices = @transform_0, window_bounds = array<i64: 8, 1024>}, {pipeline_mode = #tpu.pipeline_mode<synchronous>, transform_indices = @transform_1, window_bounds = array<i64: 1, 1024>}, {pipeline_mode = #tpu.pipeline_mode<synchronous>, transform_indices = @transform_2, window_bounds = array<i64: 1, 1024>}, {transform_indices = @transform_3, window_bounds = array<i64: 8, 1024>}]} {
    %c8_i32 = arith.constant 8 : i32
    %0 = arith.muli %arg0, %c8_i32 : i32
    %1 = tpu.iota {dimensions = array<i32: 0>} : vector<8x1xi32>
    %2 = vector.broadcast %0 : i32 to vector<8x1xi32>
    %3 = arith.addi %2, %1 : vector<8x1xi32>
    %c8_i32_0 = arith.constant 8 : i32
    %c0_i32 = arith.constant 0 : i32
    %4 = arith.cmpi eq, %c8_i32_0, %c0_i32 : i32
    %c1_i32 = arith.constant 1 : i32
    %5 = arith.select %4, %c1_i32, %c8_i32_0 : i32
    %6 = vector.broadcast %5 : i32 to vector<8x1xi32>
    %7 = arith.remsi %3, %6 : vector<8x1xi32>
    %c0_i32_1 = arith.constant 0 : i32
    %8 = vector.broadcast %c0_i32_1 : i32 to vector<8x1xi32>
    %9 = arith.cmpi ne, %7, %8 : vector<8x1xi32>
    %c0_i32_2 = arith.constant 0 : i32
    %10 = vector.broadcast %c0_i32_2 : i32 to vector<8x1xi32>
    %11 = arith.cmpi slt, %7, %10 : vector<8x1xi32>
    %c0_i32_3 = arith.constant 0 : i32
    %12 = arith.cmpi slt, %5, %c0_i32_3 : i32
    %13 = vector.broadcast %12 : i1 to vector<8x1xi1>
    %14 = vector.broadcast %13 : vector<8x1xi1> to vector<8x1xi1>
    %15 = arith.xori %11, %14 : vector<8x1xi1>
    %16 = arith.andi %15, %9 : vector<8x1xi1>
    %17 = vector.broadcast %5 : i32 to vector<8x1xi32>
    %18 = arith.addi %7, %17 : vector<8x1xi32>
    %19 = arith.select %16, %18, %7 : vector<8x1xi1>, vector<8x1xi32>
    %20 = arith.sitofp %19 : vector<8x1xi32> to vector<8x1xf32>
    %c0 = arith.constant 0 : index
    %c0_4 = arith.constant 0 : index
    %21 = vector.load %arg2[%c0, %c0_4] : memref<1x1024xf32, #tpu.memory_space<vmem>>, vector<1x1024xf32>
    %22 = vector.broadcast %20 : vector<8x1xf32> to vector<8x1024xf32>
    %23 = vector.broadcast %21 : vector<1x1024xf32> to vector<8x1024xf32>
    %24 = arith.mulf %22, %23 : vector<8x1024xf32>
    %c0_5 = arith.constant 0 : index
    %c0_6 = arith.constant 0 : index
    %25 = vector.load %arg3[%c0_5, %c0_6] : memref<1x1024xf32, #tpu.memory_space<vmem>>, vector<1x1024xf32>
    %26 = vector.broadcast %25 : vector<1x1024xf32> to vector<8x1024xf32>
    %27 = arith.addf %24, %26 : vector<8x1024xf32>
    %c0_7 = arith.constant 0 : index
    %c0_8 = arith.constant 0 : index
    %28 = vector.load %arg1[%c0_7, %c0_8] : memref<8x1024xf32, #tpu.memory_space<vmem>>, vector<8x1024xf32>
    %29 = arith.addf %28, %27 : vector<8x1024xf32>
    %c0_9 = arith.constant 0 : index
    %c0_10 = arith.constant 0 : index
    %30 = vector.load %arg4[%c0_9, %c0_10] : memref<8x1024xf32, #tpu.memory_space<vmem>>, vector<8x1024xf32>
    tpu.vector_store %arg4[%c0_9, %c0_10], %29 {strides = array<i32>} : memref<8x1024xf32, #tpu.memory_space<vmem>>, vector<8x1024xf32>,
    return
  }
  func.func @transform_0(%arg0: i32) -> (i32, i32) {
    %c0_i32 = arith.constant 0 : i32
    %c0_i32_0 = arith.constant 0 : i32
    return %arg0, %c0_i32 : i32, i32
  }
  func.func @transform_1(%arg0: i32) -> (i32, i32) {
    %c0_i32 = arith.constant 0 : i32
    %c0_i32_0 = arith.constant 0 : i32
    %c0_i32_1 = arith.constant 0 : i32
    return %c0_i32, %c0_i32_0 : i32, i32
  }
  func.func @transform_2(%arg0: i32) -> (i32, i32) {
    %c0_i32 = arith.constant 0 : i32
    %c0_i32_0 = arith.constant 0 : i32
    %c0_i32_1 = arith.constant 0 : i32
    return %c0_i32, %c0_i32_0 : i32, i32
  }
  func.func @transform_3(%arg0: i32) -> (i32, i32) {
    %c0_i32 = arith.constant 0 : i32
    %c0_i32_0 = arith.constant 0 : i32
    return %arg0, %c0_i32 : i32, i32
  }
}

</mosaic_0001>

<llo_original>
// kernel: tpu_custom_call.1
$region0: #{tpu_custom_call.1}
  #allocation0 [shape = 'u32[]', space=smem, size = 0x4, offset = 0x4, fixed_abs, tag = 'smem constant byte address 0x4 - core index']
  #allocation1 [shape = 'u32[144,128]{1,0:T(1,128)}', space=vmem, size = 0x12000, scoped, tag = 'internal scratch']
  %s0 = inlined_call_operand.hbm [shape: f32[16,1024], index: 0, kind: input, shape index: {}]
  %s1 = inlined_call_operand.hbm [shape: f32[1,1024], index: 1, kind: input, shape index: {}]
  %s2 = inlined_call_operand.hbm [shape: f32[1,1024], index: 2, kind: input, shape index: {}]
  %s3 = inlined_call_operand.hbm [shape: f32[16,1024], index: 3, kind: output, shape index: {}]
  %s4 = sld [smem:[#allocation0]]
  $region57: #{tpu_custom_call.1} parent=0
    _
  %s6 = ssub.s32 1, %s4
  %s7 = scalar_select 0, %s6, %s4
  $region1: #{tpu_custom_call.1} parent=0
    #allocation2 [shape = 'u8[65536]{0}', space=vmem, size = 0x10000, scoped, tag = 'input window, operand 0']
    #allocation3 [shape = 's32[2]{0}', space=sflag, size = 0x8, scoped, tag = 'scoped memory for tpu_custom_call.1']
    #allocation4 [shape = 's32[2]{0}', space=sflag, size = 0x8, scoped, tag = 'scoped memory for tpu_custom_call.1']
    #allocation5 [shape = 'u8[4096]{0}', space=vmem, size = 0x1000, scoped, tag = 'input window, operand 1, single buffered']
    #allocation6 [shape = 's32[1]{0}', space=sflag, size = 0x4, scoped, tag = 'scoped memory for tpu_custom_call.1']
    #allocation7 [shape = 'u8[4096]{0}', space=vmem, size = 0x1000, scoped, tag = 'input window, operand 2, single buffered']
    #allocation8 [shape = 'u8[65536]{0}', space=vmem, size = 0x10000, scoped, tag = 'output window, operand 0']
    %8 = vsyncpa [#allocation3], 0
    %s9 = scalar_lea.sflag [#allocation3], 1
    %10 = vsyncpa %s9, 0
    %11 = vsyncpa [#allocation6], 0
    %12 = vsyncpa [#allocation4], 0
    %s13 = scalar_lea.sflag [#allocation4], 1
    %14 = vsyncpa %s13, 0
    loop: start=0, step=1, limit=4
    $region2: #{tpu_custom_call.1} parent=1 // loop_pre_header
      _
    $region3: #{tpu_custom_call.1} parent=1 // loop_header
      %s16 = sphi 0, %s20
      %p17 = scmp.ge.s32.totalorder %s16, 4
      %s26 = sphi 0, %s28
      %s29 = sphi 0, %s26
      %s30 = sphi 0, %s29
      %s46 = sphi 0, %s30
      %s50 = sphi 0, %s50
      %s52 = sphi 0, %s50
      %s53 = sphi 0, %s52
      %s67 = sphi 0, %s53
      %s71 = sphi 0, %s71
      %s73 = sphi 0, %s71
      %s74 = sphi 0, %s73
      %s88 = sphi 0, %s74
      %s94 = sphi 0, %s96
      %s97 = sphi 0, %s94
      %s98 = sphi 0, %s97
      %s114 = sphi 0, %s98
    $region4: #{tpu_custom_call.1} parent=1 // loop_header_branch
      %19 = sbr.rel (%p17) target = $region8
    $region5: #{tpu_custom_call.1} parent=1 // loop_body
      %s21 = ssub.s32 %s16, 1
      %s22 = ssub.s32 %s16, 2
      %s23 = sadd.s32 %s16, 1
      %s24 = ssub.s32 %s16, %s23
      %p25 = scmp.eq.s32.totalorder %s24, 0
      %s27 = sadd.s32 %s26, 1
      %s28 = scalar_select %p25, %s26, %s27
      %p31 = pneg %p25
      %p32 = scmp.eq.s32.totalorder %s16, 1
      %p33 = por %p31, %p32
      %p34 = scmp.ne.s32.totalorder %s26, %s29
      %p35 = scmp.eq.s32.totalorder %s16, 0
      %p36 = por %p34, %p35
      %p37 = scmp.ne.s32.totalorder %s26, %s29
      %p38 = scmp.eq.s32.totalorder %s21, 1
      %p39 = por %p37, %p38
      %p40 = scmp.ne.s32.totalorder %s29, %s30
      %p41 = scmp.eq.s32.totalorder %s21, 0
      %p42 = por %p40, %p41
      %p43 = scmp.ne.s32.totalorder %s29, %s30
      %p44 = scmp.eq.s32.totalorder %s22, 1
      %p45 = por %p43, %p44
      %p47 = scmp.ne.s32.totalorder %s30, %s46
      %p48 = scmp.eq.s32.totalorder %s22, 0
      %p49 = por %p47, %p48
      %s51 = sadd.s32 %s50, 1
      %p54 = scmp.eq.s32.totalorder %s16, 1
      %p55 = scmp.ne.s32.totalorder %s50, %s52
      %p56 = scmp.eq.s32.totalorder %s16, 0
      %p57 = por %p55, %p56
      %p58 = scmp.ne.s32.totalorder %s50, %s52
      %p59 = scmp.eq.s32.totalorder %s21, 1
      %p60 = por %p58, %p59
      %p61 = scmp.ne.s32.totalorder %s52, %s53
      %p62 = scmp.eq.s32.totalorder %s21, 0
      %p63 = por %p61, %p62
      %p64 = scmp.ne.s32.totalorder %s52, %s53
      %p65 = scmp.eq.s32.totalorder %s22, 1
      %p66 = por %p64, %p65
      %p68 = scmp.ne.s32.totalorder %s53, %s67
      %p69 = scmp.eq.s32.totalorder %s22, 0
      %p70 = por %p68, %p69
      %s72 = sadd.s32 %s71, 1
      %p75 = scmp.eq.s32.totalorder %s16, 1
      %p76 = scmp.ne.s32.totalorder %s71, %s73
      %p77 = scmp.eq.s32.totalorder %s16, 0
      %p78 = por %p76, %p77
      %p79 = scmp.ne.s32.totalorder %s71, %s73
      %p80 = scmp.eq.s32.totalorder %s21, 1
      %p81 = por %p79, %p80
      %p82 = scmp.ne.s32.totalorder %s73, %s74
      %p83 = scmp.eq.s32.totalorder %s21, 0
      %p84 = por %p82, %p83
      %p85 = scmp.ne.s32.totalorder %s73, %s74
      %p86 = scmp.eq.s32.totalorder %s22, 1
      %p87 = por %p85, %p86
      %p89 = scmp.ne.s32.totalorder %s74, %s88
      %p90 = scmp.eq.s32.totalorder %s22, 0
      %p91 = por %p89, %p90
      %s92 = ssub.s32 %s16, %s23
      %p93 = scmp.eq.s32.totalorder %s92, 0
      %s95 = sadd.s32 %s94, 1
      %s96 = scalar_select %p93, %s94, %s95
      %p99 = pneg %p93
      %p100 = scmp.eq.s32.totalorder %s16, 1
      %p101 = por %p99, %p100
      %p102 = scmp.ne.s32.totalorder %s94, %s97
      %p103 = scmp.eq.s32.totalorder %s16, 0
      %p104 = por %p102, %p103
      %p105 = scmp.ne.s32.totalorder %s94, %s97
      %p106 = scmp.eq.s32.totalorder %s21, 1
      %p107 = por %p105, %p106
      %p108 = scmp.ne.s32.totalorder %s97, %s98
      %p109 = scmp.eq.s32.totalorder %s21, 0
      %p110 = por %p108, %p109
      %p111 = scmp.ne.s32.totalorder %s97, %s98
      %p112 = scmp.eq.s32.totalorder %s22, 1
      %p113 = por %p111, %p112
      %p115 = scmp.ne.s32.totalorder %s98, %s114
      %p116 = scmp.eq.s32.totalorder %s22, 0
      %p117 = por %p115, %p116
      %p118 = scmp.le.s32.totalorder 1, %s16
      %p119 = scmp.lt.s32.totalorder %s16, 3
      %p120 = pnand %p118, %p119
      %p121 = pneg %p120
      // Predicated region
      $region9: #{tpu_custom_call.1} parent=5 // pred_check
        _
      $region10: #{tpu_custom_call.1} parent=5 // pred_check_branch
        %123 = sbr.rel (%p120) target = $region12
      $region11: #{tpu_custom_call.1} parent=5 // pred_region
        %s124 = ssub.s32 %s16, 1
        // Predicated region
        $region13: #{tpu_custom_call.1} parent=11 // pred_check
          %p125 = pneg %p63
        $region14: #{tpu_custom_call.1} parent=11 // pred_check_branch
          %127 = sbr.rel (%p125) target = $region16
        $region15: #{tpu_custom_call.1} parent=11 // pred_region
          %s129 = ssub.s32 128, 128
          %130 = vsyncadd [#allocation6], %s129
          %s132 = sshll.u32 [#allocation5], 4
          %s133 = int_to_ptr.vmem [resolvable:$true] %s132
          %135 = dma.hbm_to_vmem [thread:$0]  %s1, 128, %s133, [#allocation6]
        $region16: #{tpu_custom_call.1} parent=11 // pred_fallthru
          _
        // Predicated region
        $region17: #{tpu_custom_call.1} parent=11 // pred_check
          %p136 = pneg %p84
        $region18: #{tpu_custom_call.1} parent=11 // pred_check_branch
          %138 = sbr.rel (%p136) target = $region20
        $region19: #{tpu_custom_call.1} parent=11 // pred_region
          %s140 = ssub.s32 128, 128
          %141 = vsyncadd [#allocation6], %s140
          %s143 = sshll.u32 [#allocation7], 4
          %s144 = int_to_ptr.vmem [resolvable:$true] %s143
          %146 = dma.hbm_to_vmem [thread:$0]  %s2, 128, %s144, [#allocation6]
        $region20: #{tpu_custom_call.1} parent=11 // pred_fallthru
          _
      $region12: #{tpu_custom_call.1} parent=5 // pred_fallthru
        _
      %p147 = scmp.lt.s32.totalorder %s16, 2
      // Predicated region
      $region21: #{tpu_custom_call.1} parent=5 // pred_check
        %p148 = pneg %p147
      $region22: #{tpu_custom_call.1} parent=5 // pred_check_branch
        %150 = sbr.rel (%p148) target = $region24
      $region23: #{tpu_custom_call.1} parent=5 // pred_region
        // Predicated region
        $region25: #{tpu_custom_call.1} parent=23 // pred_check
          %p151 = pneg %p36
        $region26: #{tpu_custom_call.1} parent=23 // pred_check_branch
          %153 = sbr.rel (%p151) target = $region28
        $region27: #{tpu_custom_call.1} parent=23 // pred_region
          %s154 = sand.u32 %s26, 1
          %s155 = scalar_lea.sflag [#allocation3], %s154
          %s156 = sand.u32 %s26, 1
          %s157 = smul.addr %s156, 64
          %s158 = scalar_lea.vmem [#allocation2], %s157
          %s160 = ssub.s32 1024, 1024
          %161 = vsyncadd %s155, %s160
          %s162 = smul.addr %s16, 8
          %s163 = smul.addr %s162, 128
          %s164 = scalar_lea.hbm %s0, %s163
          %s166 = sshll.u32 %s158, 4
          %s167 = int_to_ptr.vmem [resolvable:$true] %s166
          %169 = dma.hbm_to_vmem [thread:$0]  %s164, 1024, %s167, %s155
        $region28: #{tpu_custom_call.1} parent=23 // pred_fallthru
          _
      $region24: #{tpu_custom_call.1} parent=5 // pred_fallthru
        _
      %p170 = scmp.le.s32.totalorder 1, %s16
      %p171 = scmp.lt.s32.totalorder %s16, 3
      %p172 = pnand %p170, %p171
      %p173 = pneg %p172
      // Predicated region
      $region29: #{tpu_custom_call.1} parent=5 // pred_check
        _
      $region30: #{tpu_custom_call.1} parent=5 // pred_check_branch
        %175 = sbr.rel (%p172) target = $region32
      $region31: #{tpu_custom_call.1} parent=5 // pred_region
        %s176 = ssub.s32 %s16, 1
        %s177 = sand.u32 %s29, 1
        %s178 = scalar_lea.sflag [#allocation3], %s177
        %s179 = sand.u32 %s29, 1
        %s180 = smul.addr %s179, 64
        %s181 = scalar_lea.vmem [#allocation2], %s180
        // Predicated region
        $region33: #{tpu_custom_call.1} parent=31 // pred_check
          %p182 = pneg %p42
        $region34: #{tpu_custom_call.1} parent=31 // pred_check_branch
          %184 = sbr.rel (%p182) target = $region36
        $region35: #{tpu_custom_call.1} parent=31 // pred_region
          %185 = dma.done %s178, 1024
        $region36: #{tpu_custom_call.1} parent=31 // pred_fallthru
          _
        // Predicated region
        $region37: #{tpu_custom_call.1} parent=31 // pred_check
          %p186 = pneg %p63
        $region38: #{tpu_custom_call.1} parent=31 // pred_check_branch
          %188 = sbr.rel (%p186) target = $region40
        $region39: #{tpu_custom_call.1} parent=31 // pred_region
          %189 = dma.done [#allocation6], 128
        $region40: #{tpu_custom_call.1} parent=31 // pred_fallthru
          _
        // Predicated region
        $region41: #{tpu_custom_call.1} parent=31 // pred_check
          %p190 = pneg %p84
        $region42: #{tpu_custom_call.1} parent=31 // pred_check_branch
          %192 = sbr.rel (%p190) target = $region44
        $region43: #{tpu_custom_call.1} parent=31 // pred_region
          %193 = dma.done [#allocation6], 128
        $region44: #{tpu_custom_call.1} parent=31 // pred_fallthru
          _
        %s194 = sand.u32 %s29, 1
        %s195 = scalar_lea.sflag [#allocation3], %s194
        %s196 = sand.u32 %s29, 1
        %s197 = smul.addr %s196, 64
        %s198 = scalar_lea.vmem [#allocation2], %s197
        %p199 = pneg %p42
        %p200 = pneg %p39
        %p201 = pneg %p63
        %p202 = pneg %p60
        %p203 = pneg %p84
        %p204 = pneg %p81
        %p205 = pneg %p110
        %p206 = pneg %p107
        %s207 = sand.u32 %s97, 1
        %s208 = scalar_lea.sflag [#allocation4], %s207
        %s209 = sand.u32 %s97, 1
        %s210 = smul.addr %s209, 64
        %s211 = scalar_lea.vmem [#allocation8], %s210
        %s212 = smul.u32 %s21, 8
        %v213 = vlaneseq
        %v214 = vshrl.u32 %v213, 7
        %v215 = vstv %s212
        %v216 = vadd.s32 %v215, %v214
        %vm217 = vcmp.lt.s32.totalorder %v216, 0
        %v218 = vsub.s32 0, %v216
        %v219 = vsel %vm217, %v218, %v216
        %v220 = vshrl.u32 %v219, 3
        %v221 = vand.u32 %v219, 7
        %v222 = vsub.s32 0, %v221
        %v223 = vsel %vm217, %v222, %v221
        %vm224 = vcmp.ne.s32.totalorder %v223, 0
        %vm225 = vcmp.lt.s32.totalorder %v223, 0
        %vm226 = vmand %vm225, %vm224
        %v227 = vadd.s32 %v223, 8
        %v228 = vsel %vm226, %v227, %v223
        %v229 = vcvt.s32.f32 %v228
        %v230 = vld [vmem:[#allocation5] sm:$0xff]
        %v232 = vlaneseq
        %v233 = vshrl.u32 %v232, 7
        %v234 = vsub.s32 0, %v233
        %v235 = vrot.slane %v230, %v234
        %v236 = vlaneseq
        %v237 = vshrl.u32 %v236, 7
        %v238 = vsub.s32 1, %v237
        %v239 = vrot.slane %v230, %v238
        %v240 = vlaneseq
        %v241 = vshrl.u32 %v240, 7
        %v242 = vsub.s32 2, %v241
        %v243 = vrot.slane %v230, %v242
        %v244 = vlaneseq
        %v245 = vshrl.u32 %v244, 7
        %v246 = vsub.s32 3, %v245
        %v247 = vrot.slane %v230, %v246
        %v248 = vlaneseq
        %v249 = vshrl.u32 %v248, 7
        %v250 = vsub.s32 4, %v249
        %v251 = vrot.slane %v230, %v250
        %v252 = vlaneseq
        %v253 = vshrl.u32 %v252, 7
        %v254 = vsub.s32 5, %v253
        %v255 = vrot.slane %v230, %v254
        %v256 = vlaneseq
        %v257 = vshrl.u32 %v256, 7
        %v258 = vsub.s32 6, %v257
        %v259 = vrot.slane %v230, %v258
        %v260 = vlaneseq
        %v261 = vshrl.u32 %v260, 7
        %v262 = vsub.s32 7, %v261
        %v263 = vrot.slane %v230, %v262
        %v272 = vmul.f32 %v229, %v235
        %v273 = vmul.f32 %v229, %v239
        %v274 = vmul.f32 %v229, %v243
        %v275 = vmul.f32 %v229, %v247
        %v276 = vmul.f32 %v229, %v251
        %v277 = vmul.f32 %v229, %v255
        %v278 = vmul.f32 %v229, %v259
        %v279 = vmul.f32 %v229, %v263
        %v280 = vld [vmem:[#allocation7] sm:$0xff]
        %v282 = vlaneseq
        %v283 = vshrl.u32 %v282, 7
        %v284 = vsub.s32 0, %v283
        %v285 = vrot.slane %v280, %v284
        %v286 = vlaneseq
        %v287 = vshrl.u32 %v286, 7
        %v288 = vsub.s32 1, %v287
        %v289 = vrot.slane %v280, %v288
        %v290 = vlaneseq
        %v291 = vshrl.u32 %v290, 7
        %v292 = vsub.s32 2, %v291
        %v293 = vrot.slane %v280, %v292
        %v294 = vlaneseq
        %v295 = vshrl.u32 %v294, 7
        %v296 = vsub.s32 3, %v295
        %v297 = vrot.slane %v280, %v296
        %v298 = vlaneseq
        %v299 = vshrl.u32 %v298, 7
        %v300 = vsub.s32 4, %v299
        %v301 = vrot.slane %v280, %v300
        %v302 = vlaneseq
        %v303 = vshrl.u32 %v302, 7
        %v304 = vsub.s32 5, %v303
        %v305 = vrot.slane %v280, %v304
        %v306 = vlaneseq
        %v307 = vshrl.u32 %v306, 7
        %v308 = vsub.s32 6, %v307
        %v309 = vrot.slane %v280, %v308
        %v310 = vlaneseq
        %v311 = vshrl.u32 %v310, 7
        %v312 = vsub.s32 7, %v311
        %v313 = vrot.slane %v280, %v312
        %v322 = vadd.f32 %v272, %v285
        %v323 = vadd.f32 %v273, %v289
        %v324 = vadd.f32 %v274, %v293
        %v325 = vadd.f32 %v275, %v297
        %v326 = vadd.f32 %v276, %v301
        %v327 = vadd.f32 %v277, %v305
        %v328 = vadd.f32 %v278, %v309
        %v329 = vadd.f32 %v279, %v313
        %v330 = vld [vmem:[%s181] sm:$0xff]
        %v331 = vld [vmem:[%s181 + $0x8] sm:$0xff]
        %v332 = vld [vmem:[%s181 + $0x10] sm:$0xff]
        %v333 = vld [vmem:[%s181 + $0x18] sm:$0xff]
        %v334 = vld [vmem:[%s181 + $0x20] sm:$0xff]
        %v335 = vld [vmem:[%s181 + $0x28] sm:$0xff]
        %v336 = vld [vmem:[%s181 + $0x30] sm:$0xff]
        %v337 = vld [vmem:[%s181 + $0x38] sm:$0xff]
        %v338 = vadd.f32 %v330, %v322
        %v339 = vadd.f32 %v331, %v323
        %v340 = vadd.f32 %v332, %v324
        %v341 = vadd.f32 %v333, %v325
        %v342 = vadd.f32 %v334, %v326
        %v343 = vadd.f32 %v335, %v327
        %v344 = vadd.f32 %v336, %v328
        %v345 = vadd.f32 %v337, %v329
        %346 = vst [vmem:[%s211] sm:$0xff] %v338
        %347 = vst [vmem:[%s211 + $0x8] sm:$0xff] %v339
        %348 = vst [vmem:[%s211 + $0x10] sm:$0xff] %v340
        %349 = vst [vmem:[%s211 + $0x18] sm:$0xff] %v341
        %350 = vst [vmem:[%s211 + $0x20] sm:$0xff] %v342
        %351 = vst [vmem:[%s211 + $0x28] sm:$0xff] %v343
        %352 = vst [vmem:[%s211 + $0x30] sm:$0xff] %v344
        %353 = vst [vmem:[%s211 + $0x38] sm:$0xff] %v345
        %s354 = sand.u32 %s97, 1
        %s355 = scalar_lea.sflag [#allocation4], %s354
        %s356 = sand.u32 %s97, 1
        %s357 = smul.addr %s356, 64
        %s358 = scalar_lea.vmem [#allocation8], %s357
        // Predicated region
        $region45: #{tpu_custom_call.1} parent=31 // pred_check
          %p359 = pneg %p107
        $region46: #{tpu_custom_call.1} parent=31 // pred_check_branch
          %361 = sbr.rel (%p359) target = $region48
        $region47: #{tpu_custom_call.1} parent=31 // pred_region
          %s363 = ssub.s32 1024, 1024
          %364 = vsyncadd %s355, %s363
          %s365 = smul.addr %s21, 8
          %s366 = smul.addr %s365, 128
          %s367 = scalar_lea.hbm %s3, %s366
          %s369 = sshll.u32 %s358, 4
          %s370 = int_to_ptr.vmem [resolvable:$true] %s369
          %372 = dma.vmem_to_hbm [thread:$0]  %s370, 1024, %s367, %s355
        $region48: #{tpu_custom_call.1} parent=31 // pred_fallthru
          _
      $region32: #{tpu_custom_call.1} parent=5 // pred_fallthru
        _
      %p373 = scmp.le.s32.totalorder 2, %s16
      // Predicated region
      $region49: #{tpu_custom_call.1} parent=5 // pred_check
        %p374 = pneg %p373
      $region50: #{tpu_custom_call.1} parent=5 // pred_check_branch
        %376 = sbr.rel (%p374) target = $region52
      $region51: #{tpu_custom_call.1} parent=5 // pred_region
        %s377 = ssub.s32 %s16, 2
        // Predicated region
        $region53: #{tpu_custom_call.1} parent=51 // pred_check
          %p378 = pneg %p113
        $region54: #{tpu_custom_call.1} parent=51 // pred_check_branch
          %380 = sbr.rel (%p378) target = $region56
        $region55: #{tpu_custom_call.1} parent=51 // pred_region
          %s381 = sand.u32 %s98, 1
          %s382 = scalar_lea.sflag [#allocation4], %s381
          %s383 = sand.u32 %s98, 1
          %s384 = smul.addr %s383, 64
          %s385 = scalar_lea.vmem [#allocation8], %s384
          %386 = dma.done %s382, 1024
        $region56: #{tpu_custom_call.1} parent=51 // pred_fallthru
          _
      $region52: #{tpu_custom_call.1} parent=5 // pred_fallthru
        _
    $region6: #{tpu_custom_call.1} parent=1 // loop_footer
      %s20 = sadd.s32 1, %s16
    $region7: #{tpu_custom_call.1} parent=1 // loop_footer_branch
      %15 = sbr.rel target = $region3
    $region8: #{tpu_custom_call.1} parent=1 // loop_exit
      _
    %387 = vsyncpa [#allocation3], 1
    %s388 = scalar_lea.sflag [#allocation3], 1
    %389 = vsyncpa %s388, 1
    %390 = vsyncpa [#allocation6], 1
    %391 = vsyncpa [#allocation4], 1
    %s392 = scalar_lea.sflag [#allocation4], 1
    %393 = vsyncpa %s392, 1

</llo_original>
